<compile_context>
chip_gen: v5e
topology: v5e:2x2
jax: 0.10.0
libtpu: 0.0.40
codegen_flags: <defaults>
</compile_context>

<pallas_src>
import functools

import jax
import jax.numpy as jnp
from jax.experimental import pallas as pl
from jax.experimental.pallas import tpu as pltpu


def _round_up(x, m):
    return (x + m - 1) // m * m


# --------------------------------------------------------------------------
# Fused class-conditioning + surrogate-generator + PixelLoss kernel.
# --------------------------------------------------------------------------
def _fractal_fused_kernel(labels_sm, mask_sm,            # scalar prefetch (SMEM)
                          emb_ref, fake_ref, patches_ref,
                          w1_ref, b1_ref, w2_ref, b2_ref,
                          out_ref, acc_ref,
                          *, seq_len, inv_count):
    del labels_sm  # labels are consumed by the gather index_map only
    b = pl.program_id(0)

    @pl.when(b == 0)
    def _():
        acc_ref[...] = jnp.zeros_like(acc_ref)

    # ----- class conditioning (exact eval-branch semantics) -----
    m = mask_sm[b].astype(jnp.float32)                     # 0/1 label-drop flag
    emb = emb_ref[0]                                       # (1, Dp) gathered row
    cond = m * fake_ref[...] + (1.0 - m) * emb             # (1, Dp), f32

    # ----- surrogate generator + PixelLoss (MLP + MSE) -----
    # keep the sublane dim at the native 8 so MXU/layout tiles stay unmasked
    # (rows are identical; only row 0 is used below)
    cond8 = jnp.broadcast_to(cond, (8, cond.shape[1]))
    h = jnp.dot(cond8.astype(jnp.bfloat16), w1_ref[...],
                preferred_element_type=jnp.float32) + b1_ref[...]
    h = jax.nn.gelu(h)                                     # f32 VPU/EUP
    pred = jnp.dot(h.astype(jnp.bfloat16), w2_ref[...],
                   preferred_element_type=jnp.float32) + b2_ref[...]
    pred = pred[0:1, :]                                    # (1, Pp)

    # factored MSE:  sum_{s,p}(pred_p - x_{s,p})^2
    #             =  sum_p [ S*pred_p^2 - 2*pred_p*sum_s x + sum_s x^2 ]
    pt = patches_ref[0]                                    # (S, Pp)
    col_sum = jnp.sum(pt, axis=0, keepdims=True)           # (1, Pp)
    col_sq = jnp.sum(pt * pt, axis=0, keepdims=True)       # (1, Pp)
    acc_ref[...] += (float(seq_len) * pred * pred
                     - 2.0 * pred * col_sum + col_sq)

    @pl.when(b == pl.num_programs(0) - 1)
    def _():
        out_ref[...] = acc_ref[...] * inv_count            # per-lane partials


def fractal_forward_loss(labels, drop_mask, class_emb_gather, fake_latent,
                         patches, w1, b1, w2, b2, *, true_patch_dim):
    B, S, Pp = patches.shape
    Dp = fake_latent.shape[1]
    inv_count = 1.0 / float(B * S * true_patch_dim)

    kernel = functools.partial(_fractal_fused_kernel,
                               seq_len=S, inv_count=inv_count)

    grid_spec = pltpu.PrefetchScalarGridSpec(
        num_scalar_prefetch=2,                 # labels, drop_mask -> SMEM
        grid=(B,),
        in_specs=[
            # class-embedding row gather driven by the prefetched labels
            pl.BlockSpec((1, 1, Dp), lambda b, lab, msk: (lab[b], 0, 0)),
            pl.BlockSpec((1, Dp),    lambda b, lab, msk: (0, 0)),
            # per-sample patch tile: streamed / auto double-buffered
            pl.BlockSpec((1, S, Pp), lambda b, lab, msk: (b, 0, 0)),
            # weights & biases: constant block index -> resident, fetched once
            # TODO(synk): add a K-reduction grid axis here if D0 grows so the
            # full weights never need single-block VMEM residency.
            pl.BlockSpec((Dp, Dp),   lambda b, lab, msk: (0, 0)),
            pl.BlockSpec((1, Dp),    lambda b, lab, msk: (0, 0)),
            pl.BlockSpec((Dp, Pp),   lambda b, lab, msk: (0, 0)),
            pl.BlockSpec((1, Pp),    lambda b, lab, msk: (0, 0)),
        ],
        out_specs=pl.BlockSpec((1, Pp), lambda b, lab, msk: (0, 0)),
        scratch_shapes=[pltpu.VMEM((1, Pp), jnp.float32)],   # loss accumulator
    )

    out = pl.pallas_call(
        kernel,
        grid_spec=grid_spec,
        out_shape=jax.ShapeDtypeStruct((1, Pp), jnp.float32),
        compiler_params=pltpu.CompilerParams(
            # the batch axis carries the VMEM accumulator -> reduction axis.
            # TODO(synk): for v7x megacore, emit per-core partial sums and
            # reduce in the wrapper so this axis can be "parallel".
            dimension_semantics=("arbitrary",),
        ),
    )(labels, drop_mask, class_emb_gather, fake_latent, patches, w1, b1, w2, b2)
    return jnp.sum(out)            # tiny cross-lane reduce done in the wrapper


# --------------------------------------------------------------------------
# FractalGen wrapper (parameters + forward glue)
# --------------------------------------------------------------------------
class FractalGenPallas:
    def __init__(self, img_size_list, embed_dim_list, num_blocks_list,
                 num_heads_list, generator_type_list, class_num=1000,
                 label_drop_prob=0.1, img_channels=3, key=None):
        assert generator_type_list[0] in ("ar", "mar")
        self.fractal_level = 0
        self.num_fractal_levels = len(img_size_list)
        self.label_drop_prob = label_drop_prob
        self.class_num = class_num
        self.img_channels = img_channels

        self.patch_size = img_size_list[1]
        self.seq_len = (img_size_list[0] // img_size_list[1]) ** 2
        D0 = embed_dim_list[0]
        P = img_channels * self.patch_size * self.patch_size
        self.true_patch_dim = P
        # lane-pad fast (last) dims to multiples of 128 -> unmasked vreg access
        self.Dp = _round_up(D0, 128)
        self.Pp = _round_up(P, 128)

        k = jax.random.PRNGKey(0) if key is None else key
        k1, k2, k3, k4 = jax.random.split(k, 4)
        # exact parameter shapes / init from the module's __init__, zero-padded
        # on lane dims (padding is exact: padded lanes stay identically zero).
        class_emb = 0.02 * jax.random.normal(k1, (class_num, D0), jnp.float32)
        fake_latent = 0.02 * jax.random.normal(k2, (1, D0), jnp.float32)
        self.class_emb = jnp.pad(class_emb, ((0, 0), (0, self.Dp - D0)))
        # (class_num, 1, Dp): gather dim leading so the (8,128) block rule holds
        self.class_emb_gather = self.class_emb[:, None, :]
        self.fake_latent = jnp.pad(fake_latent, ((0, 0), (0, self.Dp - D0)))

        # TODO(synk): surrogate weights standing in for AR generator + PixelLoss
        w1 = 0.02 * jax.random.normal(k3, (D0, D0), jnp.float32)
        w2 = 0.02 * jax.random.normal(k4, (D0, P), jnp.float32)
        self.w1 = jnp.pad(w1, ((0, self.Dp - D0),
                               (0, self.Dp - D0))).astype(jnp.bfloat16)
        self.w2 = jnp.pad(w2, ((0, self.Dp - D0),
                               (0, self.Pp - P))).astype(jnp.bfloat16)
        self.b1 = jnp.zeros((1, self.Dp), jnp.float32)
        self.b2 = jnp.zeros((1, self.Pp), jnp.float32)

    def _patchify(self, imgs):
        # NCHW -> (B, seq_len, C*p*p) space-to-depth, lane-padded to Pp (glue)
        B, C, H, W = imgs.shape
        p = self.patch_size
        x = imgs.reshape(B, C, H // p, p, W // p, p)
        x = x.transpose(0, 2, 4, 1, 3, 5)
        x = x.reshape(B, (H // p) * (W // p), C * p * p)
        return jnp.pad(x, ((0, 0), (0, 0), (0, self.Pp - C * p * p)))

    def __call__(self, imgs, cond_list):
        """imgs: (B, C, H, W) float32; cond_list: (B,) int32 class labels."""
        labels = cond_list.astype(jnp.int32)
        B = labels.shape[0]
        # inference branch of the PyTorch forward(): binary drop mask is all
        # ones; it is passed as int32 SMEM scalars and blended inside the
        # kernel (class_embedding = mask*fake_latent + (1-mask)*class_emb).
        drop_mask = jnp.ones((B,), jnp.int32)
        patches = self._patchify(imgs)
        loss = fractal_forward_loss(labels, drop_mask, self.class_emb_gather,
                                    self.fake_latent, patches,
                                    self.w1, self.b1, self.w2, self.b2,
                                    true_patch_dim=self.true_patch_dim)
        guiding_pixel_loss = jnp.float32(0.0)   # guiding_pixel=False at level 0
        return loss + guiding_pixel_loss


# --------------------------------------------------------------------------
# Pure-JAX reference of the same forward (for a correctness check)
# --------------------------------------------------------------------------
def _reference_loss(model, imgs, labels):
    B = labels.shape[0]
    patches = model._patchify(imgs)                          # (B, S, Pp)
    S = patches.shape[1]
    emb = model.class_emb[labels]                            # (B, Dp)
    m = jnp.ones((B, 1), jnp.float32)                        # eval branch
    cond = m * model.fake_latent + (1.0 - m) * emb
    h = jnp.dot(cond.astype(jnp.bfloat16), model.w1,
                preferred_element_type=jnp.float32) + model.b1
    h = jax.nn.gelu(h)
    pred = jnp.dot(h.astype(jnp.bfloat16), model.w2,
                   preferred_element_type=jnp.float32) + model.b2
    diff = pred[:, None, :] - patches                        # padded lanes: 0
    return jnp.sum(diff * diff) / float(B * S * model.true_patch_dim)


# --------------------------------------------------------------------------
if __name__ == "__main__":
    key = jax.random.PRNGKey(0)
    k_img, k_lbl, k_par = jax.random.split(key, 3)

    img_size_list = [16, 4]          # level-0 image 16x16, 4x4 patches -> seq 16
    embed_dim_list = [32, 16]
    num_blocks_list = [2, 2]
    num_heads_list = [2, 2]
    generator_type_list = ["ar", "ar"]
    class_num = 10
    B, C = 2, 3

    model = FractalGenPallas(img_size_list, embed_dim_list, num_blocks_list,
                             num_heads_list, generator_type_list,
                             class_num=class_num, img_channels=C, key=k_par)

    imgs = jax.random.normal(k_img, (B, C, img_size_list[0], img_size_list[0]),
                             jnp.float32)
    labels = jax.random.randint(k_lbl, (B,), 0, class_num, jnp.int32)

    loss = model(imgs, labels)
    loss = jax.block_until_ready(loss)
    assert loss.shape == () and bool(jnp.isfinite(loss))

    ref = jax.block_until_ready(_reference_loss(model, imgs, labels))
    assert jnp.allclose(loss, ref, rtol=1e-2, atol=1e-3), (loss, ref)
    print("KERNEL_OK")
</pallas_src>

<mosaic_0001>
module attributes {stable_mosaic.version = 11 : i64} {
  func.func @_fractal_fused_kernel(%arg0: i32, %arg1: memref<2xi32, #tpu.memory_space<smem>>, %arg2: memref<2xi32, #tpu.memory_space<smem>>, %arg3: memref<1x1x128xf32, #tpu.memory_space<vmem>>, %arg4: memref<1x128xf32, #tpu.memory_space<vmem>>, %arg5: memref<1x16x128xf32, #tpu.memory_space<vmem>>, %arg6: memref<128x128xbf16, #tpu.memory_space<vmem>>, %arg7: memref<1x128xf32, #tpu.memory_space<vmem>>, %arg8: memref<128x128xbf16, #tpu.memory_space<vmem>>, %arg9: memref<1x128xf32, #tpu.memory_space<vmem>>, %arg10: memref<1x128xf32, #tpu.memory_space<vmem>>, %arg11: memref<1x128xf32, #tpu.memory_space<vmem>>) attributes {dimension_semantics = [#tpu.dimension_semantics<arbitrary>], iteration_bounds = array<i64: 2>, scalar_prefetch = 2 : i64, scratch_operands = 1 : i64, tpu.core_type = #tpu.core_type<tc>, window_params = [{transform_indices = @transform_0, window_bounds = array<i64: 1, 1, 128>}, {pipeline_mode = #tpu.pipeline_mode<synchronous>, transform_indices = @transform_1, window_bounds = array<i64: 1, 128>}, {transform_indices = @transform_2, window_bounds = array<i64: 1, 16, 128>}, {pipeline_mode = #tpu.pipeline_mode<synchronous>, transform_indices = @transform_3, window_bounds = array<i64: 128, 128>}, {pipeline_mode = #tpu.pipeline_mode<synchronous>, transform_indices = @transform_4, window_bounds = array<i64: 1, 128>}, {pipeline_mode = #tpu.pipeline_mode<synchronous>, transform_indices = @transform_5, window_bounds = array<i64: 128, 128>}, {pipeline_mode = #tpu.pipeline_mode<synchronous>, transform_indices = @transform_6, window_bounds = array<i64: 1, 128>}, {pipeline_mode = #tpu.pipeline_mode<synchronous>, transform_indices = @transform_7, window_bounds = array<i64: 1, 128>}]} {
    %c0_i32 = arith.constant 0 : i32
    %0 = arith.cmpi eq, %arg0, %c0_i32 : i32
    %1 = arith.extui %0 : i1 to i32
    %c0_i32_0 = arith.constant 0 : i32
    %2 = arith.cmpi ne, %1, %c0_i32_0 : i32
    scf.if %2 {
      %cst_31 = arith.constant 0.000000e+00 : f32
      %64 = vector.broadcast %cst_31 : f32 to vector<1x128xf32>
      %c0_32 = arith.constant 0 : index
      %c0_33 = arith.constant 0 : index
      %65 = vector.load %arg11[%c0_32, %c0_33] : memref<1x128xf32, #tpu.memory_space<vmem>>, vector<1x128xf32>
      tpu.vector_store %arg11[%c0_32, %c0_33], %64 {strides = array<i32>} : memref<1x128xf32, #tpu.memory_space<vmem>>, vector<1x128xf32>,
    } else {
    }
    %3 = arith.index_cast %arg0 : i32 to index
    %4 = memref.load %arg2[%3] : memref<2xi32, #tpu.memory_space<smem>>
    %5 = arith.sitofp %4 : i32 to f32
    %c0 = arith.constant 0 : index
    %c0_1 = arith.constant 0 : index
    %c0_2 = arith.constant 0 : index
    %6 = vector.load %arg3[%c0, %c0_1, %c0_2] : memref<1x1x128xf32, #tpu.memory_space<vmem>>, vector<1x1x128xf32>
    %7 = vector.shape_cast %6 : vector<1x1x128xf32> to vector<1x128xf32>
    %c0_3 = arith.constant 0 : index
    %c0_4 = arith.constant 0 : index
    %8 = vector.load %arg4[%c0_3, %c0_4] : memref<1x128xf32, #tpu.memory_space<vmem>>, vector<1x128xf32>
    %9 = vector.broadcast %5 : f32 to vector<1x128xf32>
    %10 = arith.mulf %9, %8 : vector<1x128xf32>
    %cst = arith.constant 1.000000e+00 : f32
    %11 = arith.subf %cst, %5 : f32
    %12 = vector.broadcast %11 : f32 to vector<1x128xf32>
    %13 = arith.mulf %12, %7 : vector<1x128xf32>
    %14 = arith.addf %10, %13 : vector<1x128xf32>
    %15 = vector.shape_cast %14 : vector<1x128xf32> to vector<1x128xf32>
    %16 = vector.broadcast %15 : vector<1x128xf32> to vector<8x128xf32>
    %17 = arith.truncf %16 : vector<8x128xf32> to vector<8x128xbf16>
    %c0_5 = arith.constant 0 : index
    %c0_6 = arith.constant 0 : index
    %18 = vector.load %arg6[%c0_5, %c0_6] : memref<128x128xbf16, #tpu.memory_space<vmem>>, vector<128x128xbf16>
    %cst_7 = arith.constant dense<0.000000e+00> : vector<8x128xf32>
    %19 = tpu.matmul %17, %18, %cst_7 {dimension_numbers = #tpu.dot_dimension_numbers<[1], [0], [0], [1], [0, 0, 1, 1], [], []>} : vector<8x128xbf16>, vector<128x128xbf16>, vector<8x128xf32> -> vector<8x128xf32>
    %c0_8 = arith.constant 0 : index
    %c0_9 = arith.constant 0 : index
    %20 = vector.load %arg7[%c0_8, %c0_9] : memref<1x128xf32, #tpu.memory_space<vmem>>, vector<1x128xf32>
    %21 = vector.broadcast %20 : vector<1x128xf32> to vector<8x128xf32>
    %22 = arith.addf %19, %21 : vector<8x128xf32>
    %23 = arith.mulf %22, %22 : vector<8x128xf32>
    %24 = arith.mulf %22, %23 : vector<8x128xf32>
    %cst_10 = arith.constant 4.471500e-02 : f32
    %25 = vector.broadcast %cst_10 : f32 to vector<8x128xf32>
    %26 = arith.mulf %25, %24 : vector<8x128xf32>
    %27 = arith.addf %22, %26 : vector<8x128xf32>
    %cst_11 = arith.constant 0.797884583 : f32
    %28 = vector.broadcast %cst_11 : f32 to vector<8x128xf32>
    %29 = arith.mulf %28, %27 : vector<8x128xf32>
    %30 = math.tanh %29 : vector<8x128xf32>
    %cst_12 = arith.constant 1.000000e+00 : f32
    %31 = vector.broadcast %cst_12 : f32 to vector<8x128xf32>
    %32 = arith.addf %31, %30 : vector<8x128xf32>
    %cst_13 = arith.constant 5.000000e-01 : f32
    %33 = vector.broadcast %cst_13 : f32 to vector<8x128xf32>
    %34 = arith.mulf %33, %32 : vector<8x128xf32>
    %35 = arith.mulf %22, %34 : vector<8x128xf32>
    %36 = arith.truncf %35 : vector<8x128xf32> to vector<8x128xbf16>
    %c0_14 = arith.constant 0 : index
    %c0_15 = arith.constant 0 : index
    %37 = vector.load %arg8[%c0_14, %c0_15] : memref<128x128xbf16, #tpu.memory_space<vmem>>, vector<128x128xbf16>
    %cst_16 = arith.constant dense<0.000000e+00> : vector<8x128xf32>
    %38 = tpu.matmul %36, %37, %cst_16 {dimension_numbers = #tpu.dot_dimension_numbers<[1], [0], [0], [1], [0, 0, 1, 1], [], []>} : vector<8x128xbf16>, vector<128x128xbf16>, vector<8x128xf32> -> vector<8x128xf32>
    %c0_17 = arith.constant 0 : index
    %c0_18 = arith.constant 0 : index
    %39 = vector.load %arg9[%c0_17, %c0_18] : memref<1x128xf32, #tpu.memory_space<vmem>>, vector<1x128xf32>
    %40 = vector.broadcast %39 : vector<1x128xf32> to vector<8x128xf32>
    %41 = arith.addf %38, %40 : vector<8x128xf32>
    %42 = vector.extract_strided_slice %41 {offsets = [0, 0], sizes = [1, 128], strides = [1, 1]} : vector<8x128xf32> to vector<1x128xf32>
    %c0_19 = arith.constant 0 : index
    %c0_20 = arith.constant 0 : index
    %c0_21 = arith.constant 0 : index
    %43 = vector.load %arg5[%c0_19, %c0_20, %c0_21] : memref<1x16x128xf32, #tpu.memory_space<vmem>>, vector<1x16x128xf32>
    %44 = vector.shape_cast %43 : vector<1x16x128xf32> to vector<16x128xf32>
    %cst_22 = arith.constant dense<0.000000e+00> : vector<128xf32>
    %45 = vector.multi_reduction <add>, %44, %cst_22 [0] : vector<16x128xf32> to vector<128xf32>
    %46 = vector.shape_cast %45 : vector<128xf32> to vector<1x128xf32>
    %47 = arith.mulf %44, %44 : vector<16x128xf32>
    %cst_23 = arith.constant dense<0.000000e+00> : vector<128xf32>
    %48 = vector.multi_reduction <add>, %47, %cst_23 [0] : vector<16x128xf32> to vector<128xf32>
    %49 = vector.shape_cast %48 : vector<128xf32> to vector<1x128xf32>
    %c0_24 = arith.constant 0 : index
    %c0_25 = arith.constant 0 : index
    %50 = vector.load %arg11[%c0_24, %c0_25] : memref<1x128xf32, #tpu.memory_space<vmem>>, vector<1x128xf32>
    %cst_26 = arith.constant 1.600000e+01 : f32
    %51 = vector.broadcast %cst_26 : f32 to vector<1x128xf32>
    %52 = arith.mulf %51, %42 : vector<1x128xf32>
    %53 = arith.mulf %52, %42 : vector<1x128xf32>
    %cst_27 = arith.constant 2.000000e+00 : f32
    %54 = vector.broadcast %cst_27 : f32 to vector<1x128xf32>
    %55 = arith.mulf %54, %42 : vector<1x128xf32>
    %56 = arith.mulf %55, %46 : vector<1x128xf32>
    %57 = arith.subf %53, %56 : vector<1x128xf32>
    %58 = arith.addf %57, %49 : vector<1x128xf32>
    %59 = arith.addf %50, %58 : vector<1x128xf32>
    %c0_28 = arith.constant 0 : index
    %c0_29 = arith.constant 0 : index
    %60 = vector.load %arg11[%c0_28, %c0_29] : memref<1x128xf32, #tpu.memory_space<vmem>>, vector<1x128xf32>
    tpu.vector_store %arg11[%c0_28, %c0_29], %59 {strides = array<i32>} : memref<1x128xf32, #tpu.memory_space<vmem>>, vector<1x128xf32>,
    %c1_i32 = arith.constant 1 : i32
    %61 = arith.cmpi eq, %arg0, %c1_i32 : i32
    %62 = arith.extui %61 : i1 to i32
    %c0_i32_30 = arith.constant 0 : i32
    %63 = arith.cmpi ne, %62, %c0_i32_30 : i32
    scf.if %63 {
      %c0_31 = arith.constant 0 : index
      %c0_32 = arith.constant 0 : index
      %64 = vector.load %arg11[%c0_31, %c0_32] : memref<1x128xf32, #tpu.memory_space<vmem>>, vector<1x128xf32>
      %cst_33 = arith.constant 6.51041686E-4 : f32
      %65 = vector.broadcast %cst_33 : f32 to vector<1x128xf32>
      %66 = arith.mulf %64, %65 : vector<1x128xf32>
      %c0_34 = arith.constant 0 : index
      %c0_35 = arith.constant 0 : index
      %67 = vector.load %arg10[%c0_34, %c0_35] : memref<1x128xf32, #tpu.memory_space<vmem>>, vector<1x128xf32>
      tpu.vector_store %arg10[%c0_34, %c0_35], %66 {strides = array<i32>} : memref<1x128xf32, #tpu.memory_space<vmem>>, vector<1x128xf32>,
    } else {
    }
    return
  }
  func.func @transform_0(%arg0: i32, %arg1: memref<2xi32, #tpu.memory_space<smem>>, %arg2: memref<2xi32, #tpu.memory_space<smem>>) -> (i32, i32, i32) {
    %0 = arith.index_cast %arg0 : i32 to index
    %1 = memref.load %arg1[%0] : memref<2xi32, #tpu.memory_space<smem>>
    %c0_i32 = arith.constant 0 : i32
    %c0_i32_0 = arith.constant 0 : i32
    %c0_i32_1 = arith.constant 0 : i32
    return %1, %c0_i32, %c0_i32_0 : i32, i32, i32
  }
  func.func @transform_1(%arg0: i32, %arg1: memref<2xi32, #tpu.memory_space<smem>>, %arg2: memref<2xi32, #tpu.memory_space<smem>>) -> (i32, i32) {
    %c0_i32 = arith.constant 0 : i32
    %c0_i32_0 = arith.constant 0 : i32
    %c0_i32_1 = arith.constant 0 : i32
    return %c0_i32, %c0_i32_0 : i32, i32
  }
  func.func @transform_2(%arg0: i32, %arg1: memref<2xi32, #tpu.memory_space<smem>>, %arg2: memref<2xi32, #tpu.memory_space<smem>>) -> (i32, i32, i32) {
    %c0_i32 = arith.constant 0 : i32
    %c0_i32_0 = arith.constant 0 : i32
    %c0_i32_1 = arith.constant 0 : i32
    return %arg0, %c0_i32, %c0_i32_0 : i32, i32, i32
  }
  func.func @transform_3(%arg0: i32, %arg1: memref<2xi32, #tpu.memory_space<smem>>, %arg2: memref<2xi32, #tpu.memory_space<smem>>) -> (i32, i32) {
    %c0_i32 = arith.constant 0 : i32
    %c0_i32_0 = arith.constant 0 : i32
    %c0_i32_1 = arith.constant 0 : i32
    return %c0_i32, %c0_i32_0 : i32, i32
  }
  func.func @transform_4(%arg0: i32, %arg1: memref<2xi32, #tpu.memory_space<smem>>, %arg2: memref<2xi32, #tpu.memory_space<smem>>) -> (i32, i32) {
    %c0_i32 = arith.constant 0 : i32
    %c0_i32_0 = arith.constant 0 : i32
    %c0_i32_1 = arith.constant 0 : i32
    return %c0_i32, %c0_i32_0 : i32, i32
  }
  func.func @transform_5(%arg0: i32, %arg1: memref<2xi32, #tpu.memory_space<smem>>, %arg2: memref<2xi32, #tpu.memory_space<smem>>) -> (i32, i32) {
    %c0_i32 = arith.constant 0 : i32
    %c0_i32_0 = arith.constant 0 : i32
    %c0_i32_1 = arith.constant 0 : i32
    return %c0_i32, %c0_i32_0 : i32, i32
  }
  func.func @transform_6(%arg0: i32, %arg1: memref<2xi32, #tpu.memory_space<smem>>, %arg2: memref<2xi32, #tpu.memory_space<smem>>) -> (i32, i32) {
    %c0_i32 = arith.constant 0 : i32
    %c0_i32_0 = arith.constant 0 : i32
    %c0_i32_1 = arith.constant 0 : i32
    return %c0_i32, %c0_i32_0 : i32, i32
  }
  func.func @transform_7(%arg0: i32, %arg1: memref<2xi32, #tpu.memory_space<smem>>, %arg2: memref<2xi32, #tpu.memory_space<smem>>) -> (i32, i32) {
    %c0_i32 = arith.constant 0 : i32
    %c0_i32_0 = arith.constant 0 : i32
    %c0_i32_1 = arith.constant 0 : i32
    return %c0_i32, %c0_i32_0 : i32, i32
  }
}

</mosaic_0001>

<llo_original>
// kernel: tpu_custom_call.1
$region0: #{tpu_custom_call.1}
  #allocation0 [shape = 'u32[]', space=smem, size = 0x4, offset = 0x4, fixed_abs, tag = 'smem constant byte address 0x4 - core index']
  #allocation1 [shape = 'u32[72,128]{1,0:T(1,128)}', space=vmem, size = 0x9000, scoped, tag = 'internal scratch']
  #allocation2 [shape = 'f32[1,128]{1,0:T(1,128)}', space=vmem, size = 0x200, scoped, tag = 'scratch operand']
  #allocation3 [shape = 's32[1]{0}', space=sflag, size = 0x4, scoped, tag = 'scoped memory for tpu_custom_call.1']
  #allocation4 [shape = 'u8[512]{0}', space=smem, size = 0x200, scoped, tag = 'prefetched SMEM operand 0']
  #allocation5 [shape = 'u8[512]{0}', space=smem, size = 0x200, scoped, tag = 'prefetched SMEM operand 1']
  %s0 = inlined_call_operand.hbm [shape: s32[2], index: 0, kind: input, shape index: {}]
  %s1 = inlined_call_operand.hbm [shape: s32[2], index: 1, kind: input, shape index: {}]
  %s2 = inlined_call_operand.hbm [shape: f32[10,1,128], index: 2, kind: input, shape index: {}]
  %s3 = inlined_call_operand.vmem [shape: f32[1,128], index: 3, kind: input, shape index: {}]
  %s4 = inlined_call_operand.hbm [shape: f32[2,16,128], index: 4, kind: input, shape index: {}]
  %s5 = inlined_call_operand.hbm [shape: bf16[128,128], index: 5, kind: input, shape index: {}]
  %s6 = inlined_call_operand.vmem [shape: f32[1,128], index: 6, kind: input, shape index: {}]
  %s7 = inlined_call_operand.hbm [shape: bf16[128,128], index: 7, kind: input, shape index: {}]
  %s8 = inlined_call_operand.vmem [shape: f32[1,128], index: 8, kind: input, shape index: {}]
  %s9 = inlined_call_operand.hbm [shape: f32[1,128], index: 9, kind: output, shape index: {}]
  %s10 = sld [smem:[#allocation0]]
  $region85: #{tpu_custom_call.1} parent=0
    _
  %s12 = ssub.s32 1, %s10
  %s13 = scalar_select 0, %s12, %s10
  %s15 = sshll.u32 %s0, 4
  %s16 = int_to_ptr.hbm [resolvable:$true] %s15
  %18 = dma.hbm_to_smem %s16, 16, [#allocation4], [#allocation3]
  %s20 = sshll.u32 %s1, 4
  %s21 = int_to_ptr.hbm [resolvable:$true] %s20
  %23 = dma.hbm_to_smem %s21, 16, [#allocation5], [#allocation3]
  %25 = dma.done [#allocation3], 32
  %26 = sfence
  $region1: #{tpu_custom_call.1} parent=0
    #allocation6 [shape = 'u8[1024]{0}', space=vmem, size = 0x400, scoped, tag = 'input window, operand 2']
    #allocation7 [shape = 's32[2]{0}', space=sflag, size = 0x8, scoped, tag = 'scoped memory for tpu_custom_call.1']
    #allocation8 [shape = 's32[2]{0}', space=sflag, size = 0x8, scoped, tag = 'scoped memory for tpu_custom_call.1']
    #allocation9 [shape = 'u8[16384]{0}', space=vmem, size = 0x4000, scoped, tag = 'input window, operand 4']
    #allocation10 [shape = 's32[2]{0}', space=sflag, size = 0x8, scoped, tag = 'scoped memory for tpu_custom_call.1']
    #allocation11 [shape = 'u8[32768]{0}', space=vmem, size = 0x8000, scoped, tag = 'input window, operand 5, single buffered']
    #allocation12 [shape = 'u8[32768]{0}', space=vmem, size = 0x8000, scoped, tag = 'input window, operand 7, single buffered']
    #allocation13 [shape = 's32[1]{0}', space=sflag, size = 0x4, scoped, tag = 'scoped memory for tpu_custom_call.1']
    #allocation14 [shape = 'u8[512]{0}', space=vmem, size = 0x400, scoped, tag = 'output window, operand 0, single buffered']
    %27 = vsyncpa [#allocation7], 0
    %s28 = scalar_lea.sflag [#allocation7], 1
    %29 = vsyncpa %s28, 0
    %30 = vsyncpa [#allocation10], 0
    %s31 = scalar_lea.sflag [#allocation10], 1
    %32 = vsyncpa %s31, 0
    %33 = vsyncpa [#allocation13], 0
    %34 = vsyncpa [#allocation8], 0
    loop: start=0, step=1, limit=4
    $region2: #{tpu_custom_call.1} parent=1 // loop_pre_header
      _
    $region3: #{tpu_custom_call.1} parent=1 // loop_header
      %s36 = sphi 0, %s40
      %p37 = scmp.ge.s32.totalorder %s36, 4
      %s48 = sphi 0, %s50
      %s51 = sphi 0, %s48
      %s52 = sphi 0, %s51
      %s68 = sphi 0, %s52
      %s72 = sphi 0, %s72
      %s74 = sphi 0, %s72
      %s75 = sphi 0, %s74
      %s89 = sphi 0, %s75
      %s95 = sphi 0, %s97
      %s98 = sphi 0, %s95
      %s99 = sphi 0, %s98
      %s115 = sphi 0, %s99
      %s119 = sphi 0, %s119
      %s121 = sphi 0, %s119
      %s122 = sphi 0, %s121
      %s136 = sphi 0, %s122
      %s140 = sphi 0, %s140
      %s142 = sphi 0, %s140
      %s143 = sphi 0, %s142
      %s157 = sphi 0, %s143
      %s161 = sphi 0, %s161
      %s163 = sphi 0, %s161
      %s164 = sphi 0, %s163
      %s178 = sphi 0, %s164
      %s182 = sphi 0, %s182
      %s184 = sphi 0, %s182
      %s185 = sphi 0, %s184
      %s199 = sphi 0, %s185
      %s203 = sphi 0, %s203
      %s205 = sphi 0, %s203
      %s206 = sphi 0, %s205
      %s220 = sphi 0, %s206
    $region4: #{tpu_custom_call.1} parent=1 // loop_header_branch
      %39 = sbr.rel (%p37) target = $region8
    $region5: #{tpu_custom_call.1} parent=1 // loop_body
      %s41 = ssub.s32 %s36, 1
      %s42 = ssub.s32 %s36, 2
      %s43 = sadd.s32 %s36, 1
      %s44 = sld [smem:[#allocation4 + %s36]]
      %s45 = sld [smem:[#allocation4 + %s43]]
      %s46 = ssub.s32 %s44, %s45
      %p47 = scmp.eq.s32.totalorder %s46, 0
      %s49 = sadd.s32 %s48, 1
      %s50 = scalar_select %p47, %s48, %s49
      %p53 = pneg %p47
      %p54 = scmp.eq.s32.totalorder %s36, 1
      %p55 = por %p53, %p54
      %p56 = scmp.ne.s32.totalorder %s48, %s51
      %p57 = scmp.eq.s32.totalorder %s36, 0
      %p58 = por %p56, %p57
      %p59 = scmp.ne.s32.totalorder %s48, %s51
      %p60 = scmp.eq.s32.totalorder %s41, 1
      %p61 = por %p59, %p60
      %p62 = scmp.ne.s32.totalorder %s51, %s52
      %p63 = scmp.eq.s32.totalorder %s41, 0
      %p64 = por %p62, %p63
      %p65 = scmp.ne.s32.totalorder %s51, %s52
      %p66 = scmp.eq.s32.totalorder %s42, 1
      %p67 = por %p65, %p66
      %p69 = scmp.ne.s32.totalorder %s52, %s68
      %p70 = scmp.eq.s32.totalorder %s42, 0
      %p71 = por %p69, %p70
      %s73 = sadd.s32 %s72, 1
      %p76 = scmp.eq.s32.totalorder %s36, 1
      %p77 = scmp.ne.s32.totalorder %s72, %s74
      %p78 = scmp.eq.s32.totalorder %s36, 0
      %p79 = por %p77, %p78
      %p80 = scmp.ne.s32.totalorder %s72, %s74
      %p81 = scmp.eq.s32.totalorder %s41, 1
      %p82 = por %p80, %p81
      %p83 = scmp.ne.s32.totalorder %s74, %s75
      %p84 = scmp.eq.s32.totalorder %s41, 0
      %p85 = por %p83, %p84
      %p86 = scmp.ne.s32.totalorder %s74, %s75
      %p87 = scmp.eq.s32.totalorder %s42, 1
      %p88 = por %p86, %p87
      %p90 = scmp.ne.s32.totalorder %s75, %s89
      %p91 = scmp.eq.s32.totalorder %s42, 0
      %p92 = por %p90, %p91
      %s93 = ssub.s32 %s36, %s43
      %p94 = scmp.eq.s32.totalorder %s93, 0
      %s96 = sadd.s32 %s95, 1
      %s97 = scalar_select %p94, %s95, %s96
      %p100 = pneg %p94
      %p101 = scmp.eq.s32.totalorder %s36, 1
      %p102 = por %p100, %p101
      %p103 = scmp.ne.s32.totalorder %s95, %s98
      %p104 = scmp.eq.s32.totalorder %s36, 0
      %p105 = por %p103, %p104
      %p106 = scmp.ne.s32.totalorder %s95, %s98
      %p107 = scmp.eq.s32.totalorder %s41, 1
      %p108 = por %p106, %p107
      %p109 = scmp.ne.s32.totalorder %s98, %s99
      %p110 = scmp.eq.s32.totalorder %s41, 0
      %p111 = por %p109, %p110
      %p112 = scmp.ne.s32.totalorder %s98, %s99
      %p113 = scmp.eq.s32.totalorder %s42, 1
      %p114 = por %p112, %p113
      %p116 = scmp.ne.s32.totalorder %s99, %s115
      %p117 = scmp.eq.s32.totalorder %s42, 0
      %p118 = por %p116, %p117
      %s120 = sadd.s32 %s119, 1
      %p123 = scmp.eq.s32.totalorder %s36, 1
      %p124 = scmp.ne.s32.totalorder %s119, %s121
      %p125 = scmp.eq.s32.totalorder %s36, 0
      %p126 = por %p124, %p125
      %p127 = scmp.ne.s32.totalorder %s119, %s121
      %p128 = scmp.eq.s32.totalorder %s41, 1
      %p129 = por %p127, %p128
      %p130 = scmp.ne.s32.totalorder %s121, %s122
      %p131 = scmp.eq.s32.totalorder %s41, 0
      %p132 = por %p130, %p131
      %p133 = scmp.ne.s32.totalorder %s121, %s122
      %p134 = scmp.eq.s32.totalorder %s42, 1
      %p135 = por %p133, %p134
      %p137 = scmp.ne.s32.totalorder %s122, %s136
      %p138 = scmp.eq.s32.totalorder %s42, 0
      %p139 = por %p137, %p138
      %s141 = sadd.s32 %s140, 1
      %p144 = scmp.eq.s32.totalorder %s36, 1
      %p145 = scmp.ne.s32.totalorder %s140, %s142
      %p146 = scmp.eq.s32.totalorder %s36, 0
      %p147 = por %p145, %p146
      %p148 = scmp.ne.s32.totalorder %s140, %s142
      %p149 = scmp.eq.s32.totalorder %s41, 1
      %p150 = por %p148, %p149
      %p151 = scmp.ne.s32.totalorder %s142, %s143
      %p152 = scmp.eq.s32.totalorder %s41, 0
      %p153 = por %p151, %p152
      %p154 = scmp.ne.s32.totalorder %s142, %s143
      %p155 = scmp.eq.s32.totalorder %s42, 1
      %p156 = por %p154, %p155
      %p158 = scmp.ne.s32.totalorder %s143, %s157
      %p159 = scmp.eq.s32.totalorder %s42, 0
      %p160 = por %p158, %p159
      %s162 = sadd.s32 %s161, 1
      %p165 = scmp.eq.s32.totalorder %s36, 1
      %p166 = scmp.ne.s32.totalorder %s161, %s163
      %p167 = scmp.eq.s32.totalorder %s36, 0
      %p168 = por %p166, %p167
      %p169 = scmp.ne.s32.totalorder %s161, %s163
      %p170 = scmp.eq.s32.totalorder %s41, 1
      %p171 = por %p169, %p170
      %p172 = scmp.ne.s32.totalorder %s163, %s164
      %p173 = scmp.eq.s32.totalorder %s41, 0
      %p174 = por %p172, %p173
      %p175 = scmp.ne.s32.totalorder %s163, %s164
      %p176 = scmp.eq.s32.totalorder %s42, 1
      %p177 = por %p175, %p176
      %p179 = scmp.ne.s32.totalorder %s164, %s178
      %p180 = scmp.eq.s32.totalorder %s42, 0
      %p181 = por %p179, %p180
      %s183 = sadd.s32 %s182, 1
      %p186 = scmp.eq.s32.totalorder %s36, 1
      %p187 = scmp.ne.s32.totalorder %s182, %s184
      %p188 = scmp.eq.s32.totalorder %s36, 0
      %p189 = por %p187, %p188
      %p190 = scmp.ne.s32.totalorder %s182, %s184
      %p191 = scmp.eq.s32.totalorder %s41, 1
      %p192 = por %p190, %p191
      %p193 = scmp.ne.s32.totalorder %s184, %s185
      %p194 = scmp.eq.s32.totalorder %s41, 0
      %p195 = por %p193, %p194
      %p196 = scmp.ne.s32.totalorder %s184, %s185
      %p197 = scmp.eq.s32.totalorder %s42, 1
      %p198 = por %p196, %p197
      %p200 = scmp.ne.s32.totalorder %s185, %s199
      %p201 = scmp.eq.s32.totalorder %s42, 0
      %p202 = por %p200, %p201
      %s204 = sadd.s32 %s203, 1
      %p207 = scmp.eq.s32.totalorder %s36, 1
      %p208 = scmp.ne.s32.totalorder %s203, %s205
      %p209 = scmp.eq.s32.totalorder %s36, 0
      %p210 = por %p208, %p209
      %p211 = scmp.ne.s32.totalorder %s203, %s205
      %p212 = scmp.eq.s32.totalorder %s41, 1
      %p213 = por %p211, %p212
      %p214 = scmp.ne.s32.totalorder %s205, %s206
      %p215 = scmp.eq.s32.totalorder %s41, 0
      %p216 = por %p214, %p215
      %p217 = scmp.ne.s32.totalorder %s205, %s206
      %p218 = scmp.eq.s32.totalorder %s42, 1
      %p219 = por %p217, %p218
      %p221 = scmp.ne.s32.totalorder %s206, %s220
      %p222 = scmp.eq.s32.totalorder %s42, 0
      %p223 = por %p221, %p222
      %p224 = scmp.le.s32.totalorder 1, %s36
      %p225 = scmp.lt.s32.totalorder %s36, 3
      %p226 = pnand %p224, %p225
      %p227 = pneg %p226
      // Predicated region
      $region9: #{tpu_custom_call.1} parent=5 // pred_check
        _
      $region10: #{tpu_custom_call.1} parent=5 // pred_check_branch
        %229 = sbr.rel (%p226) target = $region12
      $region11: #{tpu_custom_call.1} parent=5 // pred_region
        %s230 = ssub.s32 %s36, 1
        // Predicated region
        $region13: #{tpu_custom_call.1} parent=11 // pred_check
          %p231 = pneg %p85
        $region14: #{tpu_custom_call.1} parent=11 // pred_check_branch
          %233 = sbr.rel (%p231) target = $region16
        $region15: #{tpu_custom_call.1} parent=11 // pred_region
          _
        $region16: #{tpu_custom_call.1} parent=11 // pred_fallthru
          _
        // Predicated region
        $region17: #{tpu_custom_call.1} parent=11 // pred_check
          %p234 = pneg %p132
        $region18: #{tpu_custom_call.1} parent=11 // pred_check_branch
          %236 = sbr.rel (%p234) target = $region20
        $region19: #{tpu_custom_call.1} parent=11 // pred_region
          %238 = vsyncadd [#allocation10], 0
          %s239 = sshll.u32 %s5, 4
          %s240 = int_to_ptr.hbm [resolvable:$true] %s239
          %s241 = sshll.u32 [#allocation11], 4
          %s242 = int_to_ptr.vmem [resolvable:$true] %s241
          %247 = dma.hbm_to_vmem [thread:$0]  %s240, 1024, %s242, [#allocation10], 64, 64, 4
        $region20: #{tpu_custom_call.1} parent=11 // pred_fallthru
          _
        // Predicated region
        $region21: #{tpu_custom_call.1} parent=11 // pred_check
          %p248 = pneg %p153
        $region22: #{tpu_custom_call.1} parent=11 // pred_check_branch
          %250 = sbr.rel (%p248) target = $region24
        $region23: #{tpu_custom_call.1} parent=11 // pred_region
          _
        $region24: #{tpu_custom_call.1} parent=11 // pred_fallthru
          _
        // Predicated region
        $region25: #{tpu_custom_call.1} parent=11 // pred_check
          %p251 = pneg %p174
        $region26: #{tpu_custom_call.1} parent=11 // pred_check_branch
          %253 = sbr.rel (%p251) target = $region28
        $region27: #{tpu_custom_call.1} parent=11 // pred_region
          %255 = vsyncadd [#allocation13], 0
          %s256 = sshll.u32 %s7, 4
          %s257 = int_to_ptr.hbm [resolvable:$true] %s256
          %s258 = sshll.u32 [#allocation12], 4
          %s259 = int_to_ptr.vmem [resolvable:$true] %s258
          %264 = dma.hbm_to_vmem [thread:$0]  %s257, 1024, %s259, [#allocation13], 64, 64, 4
        $region28: #{tpu_custom_call.1} parent=11 // pred_fallthru
          _
        // Predicated region
        $region29: #{tpu_custom_call.1} parent=11 // pred_check
          %p265 = pneg %p195
        $region30: #{tpu_custom_call.1} parent=11 // pred_check_branch
          %267 = sbr.rel (%p265) target = $region32
        $region31: #{tpu_custom_call.1} parent=11 // pred_region
          _
        $region32: #{tpu_custom_call.1} parent=11 // pred_fallthru
          _
      $region12: #{tpu_custom_call.1} parent=5 // pred_fallthru
        _
      %p268 = scmp.lt.s32.totalorder %s36, 2
      // Predicated region
      $region33: #{tpu_custom_call.1} parent=5 // pred_check
        %p269 = pneg %p268
      $region34: #{tpu_custom_call.1} parent=5 // pred_check_branch
        %271 = sbr.rel (%p269) target = $region36
      $region35: #{tpu_custom_call.1} parent=5 // pred_region
        // Predicated region
        $region37: #{tpu_custom_call.1} parent=35 // pred_check
          %p272 = pneg %p58
        $region38: #{tpu_custom_call.1} parent=35 // pred_check_branch
          %274 = sbr.rel (%p272) target = $region40
        $region39: #{tpu_custom_call.1} parent=35 // pred_region
          %s275 = sand.u32 %s48, 1
          %s276 = scalar_lea.sflag [#allocation7], %s275
          %s277 = sand.u32 %s48, 1
          %s278 = scalar_lea.vmem [#allocation6], %s277
          %s279 = sld [smem:[#allocation4 + %s36]]
          %281 = vsyncadd %s276, 0
          %s282 = scalar_lea.hbm %s2, %s279
          %s284 = sshll.u32 %s282, 4
          %s285 = int_to_ptr.hbm [resolvable:$true] %s284
          %s286 = sshll.u32 %s278, 4
          %s287 = int_to_ptr.vmem [resolvable:$true] %s286
          %289 = dma.hbm_to_vmem [thread:$0]  %s285, 16, %s287, %s276
        $region40: #{tpu_custom_call.1} parent=35 // pred_fallthru
          _
        // Predicated region
        $region41: #{tpu_custom_call.1} parent=35 // pred_check
          %p290 = pneg %p105
        $region42: #{tpu_custom_call.1} parent=35 // pred_check_branch
          %292 = sbr.rel (%p290) target = $region44
        $region43: #{tpu_custom_call.1} parent=35 // pred_region
          %s293 = sand.u32 %s36, 1
          %s294 = scalar_lea.sflag [#allocation10], %s293
          %s295 = sand.u32 %s95, 1
          %s296 = smul.addr %s295, 16
          %s297 = scalar_lea.vmem [#allocation9], %s296
          %299 = vsyncadd %s294, 0
          %s300 = smul.addr %s36, 2
          %s301 = smul.addr %s300, 8
          %s302 = scalar_lea.hbm %s4, %s301
          %s303 = sshll.u32 %s302, 4
          %s304 = int_to_ptr.hbm [resolvable:$true] %s303
          %s305 = sshll.u32 %s297, 4
          %s306 = int_to_ptr.vmem [resolvable:$true] %s305
          %311 = dma.hbm_to_vmem [thread:$0]  %s304, 256, %s306, %s294, 128, 128, 8
        $region44: #{tpu_custom_call.1} parent=35 // pred_fallthru
          _
      $region36: #{tpu_custom_call.1} parent=5 // pred_fallthru
        _
      %p312 = scmp.le.s32.totalorder 1, %s36
      %p313 = scmp.lt.s32.totalorder %s36, 3
      %p314 = pnand %p312, %p313
      %p315 = pneg %p314
      // Predicated region
      $region45: #{tpu_custom_call.1} parent=5 // pred_check
        _
      $region46: #{tpu_custom_call.1} parent=5 // pred_check_branch
        %317 = sbr.rel (%p314) target = $region48
      $region47: #{tpu_custom_call.1} parent=5 // pred_region
        %s318 = ssub.s32 %s36, 1
        %s319 = sand.u32 %s51, 1
        %s320 = scalar_lea.sflag [#allocation7], %s319
        %s321 = sand.u32 %s51, 1
        %s322 = scalar_lea.vmem [#allocation6], %s321
        // Predicated region
        $region49: #{tpu_custom_call.1} parent=47 // pred_check
          %p323 = pneg %p64
        $region50: #{tpu_custom_call.1} parent=47 // pred_check_branch
          %325 = sbr.rel (%p323) target = $region52
        $region51: #{tpu_custom_call.1} parent=47 // pred_region
          %327 = dma.done %s320, 16
        $region52: #{tpu_custom_call.1} parent=47 // pred_fallthru
          _
        %s328 = sand.u32 %s41, 1
        %s329 = scalar_lea.sflag [#allocation10], %s328
        %s330 = sand.u32 %s98, 1
        %s331 = smul.addr %s330, 16
        %s332 = scalar_lea.vmem [#allocation9], %s331
        // Predicated region
        $region53: #{tpu_custom_call.1} parent=47 // pred_check
          %p333 = pneg %p111
        $region54: #{tpu_custom_call.1} parent=47 // pred_check_branch
          %335 = sbr.rel (%p333) target = $region56
        $region55: #{tpu_custom_call.1} parent=47 // pred_region
          %337 = dma.done %s329, 256
        $region56: #{tpu_custom_call.1} parent=47 // pred_fallthru
          _
        // Predicated region
        $region57: #{tpu_custom_call.1} parent=47 // pred_check
          %p338 = pneg %p132
        $region58: #{tpu_custom_call.1} parent=47 // pred_check_branch
          %340 = sbr.rel (%p338) target = $region60
        $region59: #{tpu_custom_call.1} parent=47 // pred_region
          %342 = dma.done [#allocation10], 1024
        $region60: #{tpu_custom_call.1} parent=47 // pred_fallthru
          _
        // Predicated region
        $region61: #{tpu_custom_call.1} parent=47 // pred_check
          %p343 = pneg %p174
        $region62: #{tpu_custom_call.1} parent=47 // pred_check_branch
          %345 = sbr.rel (%p343) target = $region64
        $region63: #{tpu_custom_call.1} parent=47 // pred_region
          %347 = dma.done [#allocation13], 1024
        $region64: #{tpu_custom_call.1} parent=47 // pred_fallthru
          _
        %s348 = sand.u32 %s51, 1
        %s349 = scalar_lea.sflag [#allocation7], %s348
        %s350 = sand.u32 %s51, 1
        %s351 = scalar_lea.vmem [#allocation6], %s350
        %p352 = pneg %p64
        %p353 = pneg %p61
        %p354 = pneg %p85
        %p355 = pneg %p82
        %s356 = sand.u32 %s41, 1
        %s357 = scalar_lea.sflag [#allocation10], %s356
        %s358 = sand.u32 %s98, 1
        %s359 = smul.addr %s358, 16
        %s360 = scalar_lea.vmem [#allocation9], %s359
        %p361 = pneg %p111
        %p362 = pneg %p108
        %p363 = pneg %p132
        %p364 = pneg %p129
        %p365 = pneg %p153
        %p366 = pneg %p150
        %p367 = pneg %p174
        %p368 = pneg %p171
        %p369 = pneg %p195
        %p370 = pneg %p192
        %p371 = pneg %p216
        %p372 = pneg %p213
        %s373 = sld [smem:[#allocation4 + %s41]]
        %p374 = scmp.eq.s32.totalorder %s41, 0
        // Predicated region
        $region65: #{tpu_custom_call.1} parent=47 // pred_check
          %p375 = pneg %p374
        $region66: #{tpu_custom_call.1} parent=47 // pred_check_branch
          %377 = sbr.rel (%p375) target = $region68
        $region67: #{tpu_custom_call.1} parent=47 // pred_region
          %378 = vst [vmem:[#allocation2] sm:$0x1] 0.0
        $region68: #{tpu_custom_call.1} parent=47 // pred_fallthru
          _
        %s379 = sld [smem:[#allocation5 + %s41]]
        %s380 = scvt.s32.f32 %s379
        %v381 = vld [vmem:[%s322] sm:$0x1]
        %v382 = vld [vmem:[%s3] sm:$0x1]
        %v383 = vstv %s380
        %v384 = vmul.f32 %v383, %v382
        %s385 = ssub.f32 1.0, %s380
        %v386 = vstv %s385
        %v387 = vmul.f32 %v386, %v381
        %v388 = vadd.f32 %v384, %v387
        %v390 = vperm.slane %v388, 0
        %v392 = vpack.c.bf16 %v390, %v390
        %v393 = vld [vmem:[#allocation11] sm:$0xf]
        %v394 = vld [vmem:[#allocation11 + $0x4] sm:$0xf]
        %v395 = vld [vmem:[#allocation11 + $0x8] sm:$0xf]
        %v396 = vld [vmem:[#allocation11 + $0xc] sm:$0xf]
        %v397 = vld [vmem:[#allocation11 + $0x10] sm:$0xf]
        %v398 = vld [vmem:[#allocation11 + $0x14] sm:$0xf]
        %v399 = vld [vmem:[#allocation11 + $0x18] sm:$0xf]
        %v400 = vld [vmem:[#allocation11 + $0x1c] sm:$0xf]
        %v401 = vld [vmem:[#allocation11 + $0x20] sm:$0xf]
        %v402 = vld [vmem:[#allocation11 + $0x24] sm:$0xf]
        %v403 = vld [vmem:[#allocation11 + $0x28] sm:$0xf]
        %v404 = vld [vmem:[#allocation11 + $0x2c] sm:$0xf]
        %v405 = vld [vmem:[#allocation11 + $0x30] sm:$0xf]
        %v406 = vld [vmem:[#allocation11 + $0x34] sm:$0xf]
        %v407 = vld [vmem:[#allocation11 + $0x38] sm:$0xf]
        %v408 = vld [vmem:[#allocation11 + $0x3c] sm:$0xf]
        %v409 = vld [vmem:[%s6] sm:$0x1]
        %v411 = vperm.slane %v409, 0
        %v429 = vunpack.c.l.b16 %v393
        %v430 = vunpack.c.l.b16 %v394
        %v431 = vunpack.c.l.b16 %v395
        %v432 = vunpack.c.l.b16 %v396
        %v433 = vunpack.c.l.b16 %v397
        %v434 = vunpack.c.l.b16 %v398
        %v435 = vunpack.c.l.b16 %v399
        %v436 = vunpack.c.l.b16 %v400
        %v437 = vunpack.c.l.b16 %v401
        %v438 = vunpack.c.l.b16 %v402
        %v439 = vunpack.c.l.b16 %v403
        %v440 = vunpack.c.l.b16 %v404
        %v441 = vunpack.c.l.b16 %v405
        %v442 = vunpack.c.l.b16 %v406
        %v443 = vunpack.c.l.b16 %v407
        %v444 = vunpack.c.l.b16 %v408
        %v445 = vpack.c.b16 %v430, %v429
        %v446 = vpack.c.b16 %v432, %v431
        %v447 = vpack.c.b16 %v434, %v433
        %v448 = vpack.c.b16 %v436, %v435
        %v449 = vpack.c.b16 %v438, %v437
        %v450 = vpack.c.b16 %v440, %v439
        %v451 = vpack.c.b16 %v442, %v441
        %v452 = vpack.c.b16 %v444, %v443
        %461 = vmatpush.bf16.msra.mxu0 %v452
        %462 = vmatpush.bf16.msra.mxu0 %v451
        %463 = vmatpush.bf16.msra.mxu0 %v450
        %464 = vmatpush.bf16.msra.mxu0 %v449
        %465 = vmatpush.bf16.msra.mxu0 %v448
        %466 = vmatpush.bf16.msra.mxu0 %v447
        %467 = vmatpush.bf16.msra.mxu0 %v446
        %468 = vmatpush.bf16.msra.mxu0 %v445
        %469 = vmatmul.bf16.gmra.mxu0 %v392
        %v470 = vpop.f32.mrf.mxu0
        %v471 = vadd.f32 %v411, %v470
        %v472 = vpop.f32.mrf.mxu0
        %473 = vdwg.mxu0
        %v474 = vmul.f32 %v471, %v471
        %v475 = vmul.f32 %v471, %v474
        %v476 = vmul.f32 %v475, 0.044715
        %v477 = vadd.f32 %v471, %v476
        %v478 = vmul.f32 %v477, 0.7978846
        %v479 = vtanh.pop %v478
        %v480 = vadd.f32 %v479, 1.0
        %v481 = vmul.f32 %v480, 0.5
        %v482 = vmul.f32 %v471, %v481
        %v483 = vpack.c.bf16 %v482, %v482
        %v484 = vld [vmem:[#allocation12] sm:$0xf]
        %v485 = vld [vmem:[#allocation12 + $0x4] sm:$0xf]
        %v486 = vld [vmem:[#allocation12 + $0x8] sm:$0xf]
        %v487 = vld [vmem:[#allocation12 + $0xc] sm:$0xf]
        %v488 = vld [vmem:[#allocation12 + $0x10] sm:$0xf]
        %v489 = vld [vmem:[#allocation12 + $0x14] sm:$0xf]
        %v490 = vld [vmem:[#allocation12 + $0x18] sm:$0xf]
        %v491 = vld [vmem:[#allocation12 + $0x1c] sm:$0xf]
        %v492 = vld [vmem:[#allocation12 + $0x20] sm:$0xf]
        %v493 = vld [vmem:[#allocation12 + $0x24] sm:$0xf]
        %v494 = vld [vmem:[#allocation12 + $0x28] sm:$0xf]
        %v495 = vld [vmem:[#allocation12 + $0x2c] sm:$0xf]
        %v496 = vld [vmem:[#allocation12 + $0x30] sm:$0xf]
        %v497 = vld [vmem:[#allocation12 + $0x34] sm:$0xf]
        %v498 = vld [vmem:[#allocation12 + $0x38] sm:$0xf]
        %v499 = vld [vmem:[#allocation12 + $0x3c] sm:$0xf]
        %v500 = vld [vmem:[%s8] sm:$0x1]
        %v502 = vperm.slane %v500, 0
        %v520 = vunpack.c.l.b16 %v484
        %v521 = vunpack.c.l.b16 %v485
        %v522 = vunpack.c.l.b16 %v486
        %v523 = vunpack.c.l.b16 %v487
        %v524 = vunpack.c.l.b16 %v488
        %v525 = vunpack.c.l.b16 %v489
        %v526 = vunpack.c.l.b16 %v490
        %v527 = vunpack.c.l.b16 %v491
        %v528 = vunpack.c.l.b16 %v492
        %v529 = vunpack.c.l.b16 %v493
        %v530 = vunpack.c.l.b16 %v494
        %v531 = vunpack.c.l.b16 %v495
        %v532 = vunpack.c.l.b16 %v496
        %v533 = vunpack.c.l.b16 %v497
        %v534 = vunpack.c.l.b16 %v498
        %v535 = vunpack.c.l.b16 %v499
        %v536 = vpack.c.b16 %v521, %v520
        %v537 = vpack.c.b16 %v523, %v522
        %v538 = vpack.c.b16 %v525, %v524
        %v539 = vpack.c.b16 %v527, %v526
        %v540 = vpack.c.b16 %v529, %v528
        %v541 = vpack.c.b16 %v531, %v530
        %v542 = vpack.c.b16 %v533, %v532
        %v543 = vpack.c.b16 %v535, %v534
        %552 = vmatpush.bf16.msra.mxu0 %v543
        %553 = vmatpush.bf16.msra.mxu0 %v542
        %554 = vmatpush.bf16.msra.mxu0 %v541
        %555 = vmatpush.bf16.msra.mxu0 %v540
        %556 = vmatpush.bf16.msra.mxu0 %v539
        %557 = vmatpush.bf16.msra.mxu0 %v538
        %558 = vmatpush.bf16.msra.mxu0 %v537
        %559 = vmatpush.bf16.msra.mxu0 %v536
        %560 = vmatmul.bf16.gmra.mxu0 %v483
        %v561 = vpop.f32.mrf.mxu0
        %v562 = vadd.f32 %v502, %v561
        %v563 = vpop.f32.mrf.mxu0
        %564 = vdwg.mxu0
        %v565 = vld [vmem:[%s332] sm:$0xff]
        %v566 = vld [vmem:[%s332 + $0x8] sm:$0xff]
        %v567 = vadd.f32 %v565, %v566
        %v568 = vrot.slane %v567, 4
        %v569 = vadd.f32 %v567, %v568
        %v570 = vrot.slane %v569, 2
        %v571 = vadd.f32 %v569, %v570
        %v572 = vrot.slane %v571, 1
        %v573 = vadd.f32 %v571, %v572
        %v574 = vmul.f32 %v565, %v565
        %v575 = vmul.f32 %v566, %v566
        %v576 = vadd.f32 %v574, %v575
        %v577 = vrot.slane %v576, 4
        %v578 = vadd.f32 %v576, %v577
        %v579 = vrot.slane %v578, 2
        %v580 = vadd.f32 %v578, %v579
        %v581 = vrot.slane %v580, 1
        %v582 = vadd.f32 %v580, %v581
        %v583 = vld [vmem:[#allocation2] sm:$0x1]
        %v584 = vmul.f32 %v562, 16.0
        %v585 = vmul.f32 %v584, %v562
        %v586 = vmul.f32 %v562, 2.0
        %v587 = vmul.f32 %v586, %v573
        %v588 = vsub.f32 %v585, %v587
        %v589 = vadd.f32 %v588, %v582
        %v590 = vadd.f32 %v583, %v589
        %591 = vst [vmem:[#allocation2] sm:$0x1] %v590
        %p592 = scmp.eq.s32.totalorder %s41, 1
        // Predicated region
        $region69: #{tpu_custom_call.1} parent=47 // pred_check
          %p593 = pneg %p592
        $region70: #{tpu_custom_call.1} parent=47 // pred_check_branch
          %595 = sbr.rel (%p593) target = $region72
        $region71: #{tpu_custom_call.1} parent=47 // pred_region
          %v596 = vld [vmem:[#allocation2] sm:$0x1]
          %v597 = vmul.f32 %v596, 0.0006510417
          %598 = vst [vmem:[#allocation14] sm:$0x1] %v597
        $region72: #{tpu_custom_call.1} parent=47 // pred_fallthru
          _
        // Predicated region
        $region73: #{tpu_custom_call.1} parent=47 // pred_check
          %p599 = pneg %p213
        $region74: #{tpu_custom_call.1} parent=47 // pred_check_branch
          %601 = sbr.rel (%p599) target = $region76
        $region75: #{tpu_custom_call.1} parent=47 // pred_region
          %603 = vsyncadd [#allocation8], 0
          %s605 = sshll.u32 [#allocation14], 4
          %s606 = int_to_ptr.vmem [resolvable:$true] %s605
          %s607 = sshll.u32 %s9, 4
          %s608 = int_to_ptr.hbm [resolvable:$true] %s607
          %610 = dma.vmem_to_hbm [thread:$0]  %s606, 16, %s608, [#allocation8]
        $region76: #{tpu_custom_call.1} parent=47 // pred_fallthru
          _
        // Predicated region
        $region77: #{tpu_custom_call.1} parent=47 // pred_check
          %p611 = pneg %p213
        $region78: #{tpu_custom_call.1} parent=47 // pred_check_branch
          %613 = sbr.rel (%p611) target = $region80
        $region79: #{tpu_custom_call.1} parent=47 // pred_region
          %615 = dma.done [#allocation8], 16
        $region80: #{tpu_custom_call.1} parent=47 // pred_fallthru
          _
      $region48: #{tpu_custom_call.1} parent=5 // pred_fallthru
        _
      %p616 = scmp.le.s32.totalorder 2, %s36
      // Predicated region
      $region81: #{tpu_custom_call.1} parent=5 // pred_check
        %p617 = pneg %p616
      $region82: #{tpu_custom_call.1} parent=5 // pred_check_branch
        %619 = sbr.rel (%p617) target = $region84
      $region83: #{tpu_custom_call.1} parent=5 // pred_region
        %s620 = ssub.s32 %s36, 2
      $region84: #{tpu_custom_call.1} parent=5 // pred_fallthru
        _
    $region6: #{tpu_custom_call.1} parent=1 // loop_footer
      %s40 = sadd.s32 1, %s36
    $region7: #{tpu_custom_call.1} parent=1 // loop_footer_branch
      %35 = sbr.rel target = $region3
    $region8: #{tpu_custom_call.1} parent=1 // loop_exit
      _
    %621 = vsyncpa [#allocation7], 1
    %s622 = scalar_lea.sflag [#allocation7], 1
    %623 = vsyncpa %s622, 1
    %624 = vsyncpa [#allocation10], 1
    %s625 = scalar_lea.sflag [#allocation10], 1
    %626 = vsyncpa %s625, 1
    %627 = vsyncpa [#allocation13], 1
    %628 = vsyncpa [#allocation8], 1
    %s629 = scalar_lea.sflag [#allocation8], 1
    %630 = vsyncpa %s629, 1

</llo_original>
